<compile_context>
chip_gen: v7x
topology: tpu7x:2x2x1
jax: 0.10.0
libtpu: 0.0.40
codegen_flags: <defaults>
</compile_context>

<pallas_src>
import jax
import jax.numpy as jnp
from jax.experimental import pallas as pl
from jax.experimental.pallas import tpu as pltpu


def _concat_last_kernel(x_ref, o_ref):
    x = x_ref[...]
    # One full-tile store of the duplicated block (lane-dense when 2*d is a
    # multiple of 128), rather than two masked half-width stores.
    o_ref[...] = jnp.concatenate([x, x], axis=-1)


def _pick_tile_rows(rows, d, itemsize):
    """Row-tile size: sublane-aligned, divides rows, ~2 MiB output tile."""
    target_bytes = 2 * 1024 * 1024  # per output tile; x2 buffers + input tile
    tile = target_bytes // max(1, 2 * d * itemsize)
    tile = min(tile, rows)
    tile = (tile // 8) * 8  # sublane-aligned rows
    if tile < 8 or rows % 8 != 0:
        return rows  # full-extent block is always a legal block shape
    while rows % tile != 0:  # keep every grid step a full tile
        tile -= 8
    return tile


def toy_decoder_forward(x, tile_rows=None):
    """Equivalent of ToyDecoder.forward: concat(x, x) along the last axis."""
    orig_shape = x.shape
    d = orig_shape[-1]
    rows = 1
    for s in orig_shape[:-1]:
        rows *= s
    x2d = x.reshape(rows, d)
    itemsize = jnp.dtype(x.dtype).itemsize

    tile_r = tile_rows if tile_rows is not None else _pick_tile_rows(
        rows, d, itemsize)
    grid = (rows // tile_r,)

    out2d = pl.pallas_call(
        _concat_last_kernel,
        out_shape=jax.ShapeDtypeStruct((rows, 2 * d), x.dtype),
        grid=grid,
        in_specs=[pl.BlockSpec((tile_r, d), lambda i: (i, 0))],
        out_specs=pl.BlockSpec((tile_r, 2 * d), lambda i: (i, 0)),
        compiler_params=pltpu.CompilerParams(
            dimension_semantics=("parallel",)),
        cost_estimate=pl.CostEstimate(
            flops=0,
            transcendentals=0,
            bytes_accessed=3 * rows * d * itemsize),  # read x, write 2x
    )(x2d)

    return out2d.reshape(*orig_shape[:-1], 2 * d)


def forward_length(l_in):
    return l_in * 2


def reverse_length(l_out):
    return l_out // 2


if __name__ == "__main__":
    key = jax.random.PRNGKey(0)
    # Small NCHW-style input consistent with the module's generic forward.
    x = jax.random.normal(key, (2, 4, 16, 16), dtype=jnp.float32)
    ref = jnp.concatenate((x, x), axis=-1)

    # Default path (auto tile selection; single tile at this tiny size).
    out = jax.block_until_ready(toy_decoder_forward(x))
    assert out.shape == (2, 4, 16, 32), out.shape
    assert forward_length(16) == out.shape[-1]
    assert reverse_length(out.shape[-1]) == 16
    assert jnp.array_equal(out, ref), "mismatch vs reference concat (auto tile)"

    # Explicit multi-step grid to exercise the pipelined/tiled path
    # (rows = 2*4*16 = 128, tile 32 -> grid of 4 steps).
    out_tiled = jax.block_until_ready(toy_decoder_forward(x, tile_rows=32))
    assert jnp.array_equal(out_tiled, ref), "mismatch vs reference (tiled)"

    print("KERNEL_OK")
</pallas_src>

<mosaic_0001>
module attributes {stable_mosaic.version = 11 : i64} {
  func.func @_concat_last_kernel(%arg0: i32, %arg1: memref<128x16xf32, #tpu.memory_space<vmem>>, %arg2: memref<128x32xf32, #tpu.memory_space<vmem>>) attributes {dimension_semantics = [#tpu.dimension_semantics<parallel>], iteration_bounds = array<i64: 1>, scalar_prefetch = 0 : i64, scratch_operands = 0 : i64, tpu.core_type = #tpu.core_type<tc>, window_params = [{transform_indices = @transform_0, window_bounds = array<i64: 128, 16>}, {transform_indices = @transform_1, window_bounds = array<i64: 128, 32>}]} {
    %c0 = arith.constant 0 : index
    %c0_0 = arith.constant 0 : index
    %0 = vector.load %arg1[%c0, %c0_0] : memref<128x16xf32, #tpu.memory_space<vmem>>, vector<128x16xf32>
    %1 = tpu.concatenate %0, %0 in 1 : vector<128x16xf32>, vector<128x16xf32> -> vector<128x32xf32>
    %c0_1 = arith.constant 0 : index
    %c0_2 = arith.constant 0 : index
    %2 = vector.load %arg2[%c0_1, %c0_2] : memref<128x32xf32, #tpu.memory_space<vmem>>, vector<128x32xf32>
    tpu.vector_store %arg2[%c0_1, %c0_2], %1 {strides = array<i32>} : memref<128x32xf32, #tpu.memory_space<vmem>>, vector<128x32xf32>,
    return
  }
  func.func @transform_0(%arg0: i32) -> (i32, i32) {
    %c0_i32 = arith.constant 0 : i32
    %c0_i32_0 = arith.constant 0 : i32
    return %arg0, %c0_i32 : i32, i32
  }
  func.func @transform_1(%arg0: i32) -> (i32, i32) {
    %c0_i32 = arith.constant 0 : i32
    %c0_i32_0 = arith.constant 0 : i32
    return %arg0, %c0_i32 : i32, i32
  }
}

</mosaic_0001>

<llo_original>
// kernel: tpu_custom_call.1
$region0: #{tpu_custom_call.1}
  #allocation0 [shape = 'u32[]', space=smem, size = 0x4, offset = 0x4, fixed_abs, tag = 'smem constant byte address 0x4 - core index']
  #allocation1 [shape = 'u32[144,128]{1,0:T(1,128)}', space=vmem, size = 0x12000, scoped, tag = 'internal scratch']
  %s0 = inlined_call_operand.vmem [shape: f32[128,16], index: 0, kind: input, shape index: {}]
  %s1 = inlined_call_operand.vmem [shape: f32[128,32], index: 1, kind: output, shape index: {}]
  %s2 = sld [smem:[#allocation0]]
  $region14: #{tpu_custom_call.1} parent=0
    _
  %s4 = ssub.s32 1, %s2
  %s5 = scalar_select 0, %s4, %s2
  // Predicated region
  $region2: #{tpu_custom_call.1} parent=0 // pred_check
    _
  $region3: #{tpu_custom_call.1} parent=0 // pred_check_branch
    %7 = sbr.rel (0) target = $region5
  $region4: #{tpu_custom_call.1} parent=0 // pred_region
    _
  $region5: #{tpu_custom_call.1} parent=0 // pred_fallthru
    _
  %v8 = vld [vmem:[%s0] sm:$0xff]
  %v9 = vld [vmem:[%s0 + $0x8] sm:$0xff]
  %v10 = vld [vmem:[%s0 + $0x10] sm:$0xff]
  %v11 = vld [vmem:[%s0 + $0x18] sm:$0xff]
  %v12 = vld [vmem:[%s0 + $0x20] sm:$0xff]
  %v13 = vld [vmem:[%s0 + $0x28] sm:$0xff]
  %v14 = vld [vmem:[%s0 + $0x30] sm:$0xff]
  %v15 = vld [vmem:[%s0 + $0x38] sm:$0xff]
  %v16 = vld [vmem:[%s0 + $0x40] sm:$0xff]
  %v17 = vld [vmem:[%s0 + $0x48] sm:$0xff]
  %v18 = vld [vmem:[%s0 + $0x50] sm:$0xff]
  %v19 = vld [vmem:[%s0 + $0x58] sm:$0xff]
  %v20 = vld [vmem:[%s0 + $0x60] sm:$0xff]
  %v21 = vld [vmem:[%s0 + $0x68] sm:$0xff]
  %v22 = vld [vmem:[%s0 + $0x70] sm:$0xff]
  %v23 = vld [vmem:[%s0 + $0x78] sm:$0xff]
  %40 = vrot.lane.b32.xlu0 %v8, 16
  %v41 = vpop.permute.xlu0 %40
  %42 = vrot.lane.b32.xlu0 %v9, 16
  %v43 = vpop.permute.xlu0 %42
  %44 = vrot.lane.b32.xlu0 %v10, 16
  %v45 = vpop.permute.xlu0 %44
  %46 = vrot.lane.b32.xlu0 %v11, 16
  %v47 = vpop.permute.xlu0 %46
  %48 = vrot.lane.b32.xlu0 %v12, 16
  %v49 = vpop.permute.xlu0 %48
  %50 = vrot.lane.b32.xlu0 %v13, 16
  %v51 = vpop.permute.xlu0 %50
  %52 = vrot.lane.b32.xlu0 %v14, 16
  %v53 = vpop.permute.xlu0 %52
  %54 = vrot.lane.b32.xlu0 %v15, 16
  %v55 = vpop.permute.xlu0 %54
  %56 = vrot.lane.b32.xlu0 %v16, 16
  %v57 = vpop.permute.xlu0 %56
  %58 = vrot.lane.b32.xlu0 %v17, 16
  %v59 = vpop.permute.xlu0 %58
  %60 = vrot.lane.b32.xlu0 %v18, 16
  %v61 = vpop.permute.xlu0 %60
  %62 = vrot.lane.b32.xlu0 %v19, 16
  %v63 = vpop.permute.xlu0 %62
  %64 = vrot.lane.b32.xlu0 %v20, 16
  %v65 = vpop.permute.xlu0 %64
  %66 = vrot.lane.b32.xlu0 %v21, 16
  %v67 = vpop.permute.xlu0 %66
  %68 = vrot.lane.b32.xlu0 %v22, 16
  %v69 = vpop.permute.xlu0 %68
  %70 = vrot.lane.b32.xlu0 %v23, 16
  %v71 = vpop.permute.xlu0 %70
  %vm88 = vcmask 130048
  %v89 = vsel %vm88, %v8, %v41
  %v90 = vsel %vm88, %v9, %v43
  %v91 = vsel %vm88, %v10, %v45
  %v92 = vsel %vm88, %v11, %v47
  %v93 = vsel %vm88, %v12, %v49
  %v94 = vsel %vm88, %v13, %v51
  %v95 = vsel %vm88, %v14, %v53
  %v96 = vsel %vm88, %v15, %v55
  %v97 = vsel %vm88, %v16, %v57
  %v98 = vsel %vm88, %v17, %v59
  %v99 = vsel %vm88, %v18, %v61
  %v100 = vsel %vm88, %v19, %v63
  %v101 = vsel %vm88, %v20, %v65
  %v102 = vsel %vm88, %v21, %v67
  %v103 = vsel %vm88, %v22, %v69
  %v104 = vsel %vm88, %v23, %v71
  %vm105 = vcmask 261120
  %106 = vst.msk [vmem:[%s1] sm:$0xff] %vm105, %v89
  %107 = vst.msk [vmem:[%s1 + $0x8] sm:$0xff] %vm105, %v90
  %108 = vst.msk [vmem:[%s1 + $0x10] sm:$0xff] %vm105, %v91
  %109 = vst.msk [vmem:[%s1 + $0x18] sm:$0xff] %vm105, %v92
  %110 = vst.msk [vmem:[%s1 + $0x20] sm:$0xff] %vm105, %v93
  %111 = vst.msk [vmem:[%s1 + $0x28] sm:$0xff] %vm105, %v94
  %112 = vst.msk [vmem:[%s1 + $0x30] sm:$0xff] %vm105, %v95
  %113 = vst.msk [vmem:[%s1 + $0x38] sm:$0xff] %vm105, %v96
  %114 = vst.msk [vmem:[%s1 + $0x40] sm:$0xff] %vm105, %v97
  %115 = vst.msk [vmem:[%s1 + $0x48] sm:$0xff] %vm105, %v98
  %116 = vst.msk [vmem:[%s1 + $0x50] sm:$0xff] %vm105, %v99
  %117 = vst.msk [vmem:[%s1 + $0x58] sm:$0xff] %vm105, %v100
  %118 = vst.msk [vmem:[%s1 + $0x60] sm:$0xff] %vm105, %v101
  %119 = vst.msk [vmem:[%s1 + $0x68] sm:$0xff] %vm105, %v102
  %120 = vst.msk [vmem:[%s1 + $0x70] sm:$0xff] %vm105, %v103
  %121 = vst.msk [vmem:[%s1 + $0x78] sm:$0xff] %vm105, %v104
  // Predicated region
  $region6: #{tpu_custom_call.1} parent=0 // pred_check
    _
  $region7: #{tpu_custom_call.1} parent=0 // pred_check_branch
    %123 = sbr.rel (0) target = $region9
  $region8: #{tpu_custom_call.1} parent=0 // pred_region
    _
  $region9: #{tpu_custom_call.1} parent=0 // pred_fallthru
    _
  // Predicated region
  $region10: #{tpu_custom_call.1} parent=0 // pred_check
    _
  $region11: #{tpu_custom_call.1} parent=0 // pred_check_branch
    %125 = sbr.rel (0) target = $region13
  $region12: #{tpu_custom_call.1} parent=0 // pred_region
    _
  $region13: #{tpu_custom_call.1} parent=0 // pred_fallthru
    _

</llo_original>
